<compile_context>
chip_gen: v7x
topology: tpu7x:2x2x1
jax: 0.10.0
libtpu: 0.0.40
codegen_flags: <defaults>
</compile_context>

<pallas_src>
import functools

import jax
import jax.numpy as jnp
from jax.experimental import pallas as pl
from jax.experimental.pallas import tpu as pltpu

HIDDEN = 128
LANE = 128
BN_EPS = 1e-5


# ----------------------- kernel 1: GCN layer + bn0 stats ---------------------
def gcn_kernel(a_ref, x_ref, wg_ref, bias_ref, h0_ref, stats0_ref):
    i = pl.program_id(0)

    @pl.when(i == 0)
    def _():
        stats0_ref[...] = jnp.zeros_like(stats0_ref)

    # (TM, N) @ (N, Sp) then (TM, Sp) @ (Sp, H)  -- bf16 MXU, f32 accumulation.
    ax = jnp.dot(a_ref[...], x_ref[...], preferred_element_type=jnp.float32)
    h0 = jnp.dot(ax.astype(jnp.bfloat16), wg_ref[...],
                 preferred_element_type=jnp.float32)
    h0 = jnp.maximum(h0 + bias_ref[0:1, :], 0.0)          # + b_gcn, relu
    h0_ref[...] = h0

    # one-pass BatchNorm statistics (sum, sum of squares), f32 accumulation.
    s = jnp.sum(h0, axis=0, keepdims=True)
    ss = jnp.sum(h0 * h0, axis=0, keepdims=True)
    stats0_ref[...] += jnp.concatenate(
        [s, ss, jnp.zeros((6, HIDDEN), jnp.float32)], axis=0)


# -------- kernel 2: bn0 -> fc1/fc2 -> bn1/bn2 -> mean-pool -> fc3 ------------
def head_kernel(inv_n, b3_ref, h0_ref, stats0_ref, act_ref, pool_ref,
                w1_ref, w2_ref, w3_ref, bias_ref,
                q_ref, pooled1_ref, pooled2_ref, stats12_ref):
    i = pl.program_id(0)
    nt = pl.num_programs(0)

    @pl.when(i == 0)
    def _():
        pooled1_ref[...] = jnp.zeros_like(pooled1_ref)
        pooled2_ref[...] = jnp.zeros_like(pooled2_ref)
        stats12_ref[...] = jnp.zeros_like(stats12_ref)

    # bn0 from the accumulated node-wise sum / sum-of-squares (f32 math).
    mean0 = stats0_ref[0:1, :] * inv_n
    var0 = jnp.maximum(stats0_ref[1:2, :] * inv_n - mean0 * mean0, 0.0)
    h0n = (h0_ref[...] - mean0) * jax.lax.rsqrt(var0 + BN_EPS)

    # fc1 -> relu
    h1 = jnp.dot(h0n.astype(jnp.bfloat16), w1_ref[...],
                 preferred_element_type=jnp.float32)
    h1 = jnp.maximum(h1 + bias_ref[1:2, :], 0.0)

    # fc2(action) -> relu
    h2 = jnp.dot(act_ref[...], w2_ref[...],
                 preferred_element_type=jnp.float32)
    h2 = jnp.maximum(h2 + bias_ref[2:3, :], 0.0)

    # Mean-pool partial contributions. Pool rows sum to 1 (global_mean_pool),
    # so per-feature BatchNorm commutes with the pooling matmul and is applied
    # once at the very end:  P @ bn(h) == (P @ h - mean) * inv_std.
    p = pool_ref[...]                                     # (G, TM) bf16
    pooled1_ref[...] += jnp.dot(p, h1.astype(jnp.bfloat16),
                                preferred_element_type=jnp.float32)
    pooled2_ref[...] += jnp.dot(p, h2.astype(jnp.bfloat16),
                                preferred_element_type=jnp.float32)

    # bn1 / bn2 statistics (one pass).
    s1 = jnp.sum(h1, axis=0, keepdims=True)
    ss1 = jnp.sum(h1 * h1, axis=0, keepdims=True)
    s2 = jnp.sum(h2, axis=0, keepdims=True)
    ss2 = jnp.sum(h2 * h2, axis=0, keepdims=True)
    stats12_ref[...] += jnp.concatenate(
        [s1, ss1, s2, ss2, jnp.zeros((4, HIDDEN), jnp.float32)], axis=0)

    @pl.when(i == nt - 1)
    def _():
        m1 = stats12_ref[0:1, :] * inv_n
        v1 = jnp.maximum(stats12_ref[1:2, :] * inv_n - m1 * m1, 0.0)
        m2 = stats12_ref[2:3, :] * inv_n
        v2 = jnp.maximum(stats12_ref[3:4, :] * inv_n - m2 * m2, 0.0)
        pb1 = (pooled1_ref[...] - m1) * jax.lax.rsqrt(v1 + BN_EPS)   # (G, H)
        pb2 = (pooled2_ref[...] - m2) * jax.lax.rsqrt(v2 + BN_EPS)   # (G, H)
        # fc3 as a VPU multiply + lane reduction (no degenerate (2H,1) matmul).
        q = jnp.sum(pb1 * w3_ref[0:1, :] + pb2 * w3_ref[1:2, :],
                    axis=1, keepdims=True) + b3_ref[0]               # (G, 1)
        q_ref[...] = jnp.broadcast_to(q, q_ref.shape)                # lane-dense


# ------------------------------ wrapper --------------------------------------
def critic_forward(params, x, a_hat, action, pool, *, tile_m=128):
    n = x.shape[0]
    g = pool.shape[0]
    assert n % tile_m == 0, "demo assumes num_nodes is a multiple of tile_m"
    nt = n // tile_m

    def pad_cols(a):   # pad feature (lane) dim up to a multiple of 128
        k = a.shape[1]
        kp = ((k + LANE - 1) // LANE) * LANE
        return jnp.pad(a, ((0, 0), (0, kp - k)))

    def pad_rows(w):   # pad contraction dim of the matching weight
        k = w.shape[0]
        kp = ((k + LANE - 1) // LANE) * LANE
        return jnp.pad(w, ((0, kp - k), (0, 0)))

    # bf16 matmul operands (f32 accumulation happens inside the kernels).
    x_p = pad_cols(x).astype(jnp.bfloat16)
    act_p = pad_cols(action).astype(jnp.bfloat16)
    wg = pad_rows(params["w_gcn"]).astype(jnp.bfloat16)
    w1 = params["w1"].astype(jnp.bfloat16)
    w2 = pad_rows(params["w2"]).astype(jnp.bfloat16)
    a_hat_b = a_hat.astype(jnp.bfloat16)
    pool_b = pool.astype(jnp.bfloat16)

    # Pack the three (1, H) biases into a single (8, H) VMEM tile.
    bias_pack = jnp.zeros((8, HIDDEN), jnp.float32)
    bias_pack = bias_pack.at[0].set(params["b_gcn"].reshape(-1))
    bias_pack = bias_pack.at[1].set(params["b1"].reshape(-1))
    bias_pack = bias_pack.at[2].set(params["b2"].reshape(-1))
    # fc3 weight as two H-wide rows (h1 half, h2 half); b3 as an SMEM scalar.
    w3_pack = params["w3"][:, 0].reshape(2, HIDDEN).astype(jnp.float32)
    b3 = params["b3"].reshape(1).astype(jnp.float32)

    sp = x_p.shape[1]
    ap = act_p.shape[1]

    cparams = pltpu.CompilerParams(
        # The grid axis carries the BN / pooling accumulators -> "arbitrary".
        dimension_semantics=("arbitrary",),
        vmem_limit_bytes=32 * 1024 * 1024,   # stay within v7x's smaller VMEM
    )

    # --- pass 1: GCN layer + bn0 statistics (tiled over node rows) -----------
    h0, stats0 = pl.pallas_call(
        gcn_kernel,
        out_shape=(jax.ShapeDtypeStruct((n, HIDDEN), jnp.float32),
                   jax.ShapeDtypeStruct((8, HIDDEN), jnp.float32)),
        grid_spec=pltpu.PrefetchScalarGridSpec(
            num_scalar_prefetch=0, grid=(nt,),
            in_specs=[
                pl.BlockSpec((tile_m, n), lambda i: (i, 0)),       # A_hat rows
                pl.BlockSpec((n, sp), lambda i: (0, 0)),           # X (resident)
                pl.BlockSpec((sp, HIDDEN), lambda i: (0, 0)),      # W_gcn
                pl.BlockSpec((8, HIDDEN), lambda i: (0, 0)),       # bias pack
            ],
            out_specs=[
                pl.BlockSpec((tile_m, HIDDEN), lambda i: (i, 0)),  # h0
                pl.BlockSpec((8, HIDDEN), lambda i: (0, 0)),       # bn0 stats acc
            ]),
        compiler_params=cparams,
    )(a_hat_b, x_p, wg, bias_pack)

    # --- pass 2: bn0 -> fc1/fc2 -> bn1/bn2 -> mean pool -> fc3 ---------------
    q_full = pl.pallas_call(
        functools.partial(head_kernel, 1.0 / n),
        out_shape=jax.ShapeDtypeStruct((g, LANE), jnp.float32),
        grid_spec=pltpu.PrefetchScalarGridSpec(
            num_scalar_prefetch=0, grid=(nt,),
            in_specs=[
                pl.BlockSpec(memory_space=pltpu.MemorySpace.SMEM),  # b3 scalar
                pl.BlockSpec((tile_m, HIDDEN), lambda i: (i, 0)),   # h0 tile
                pl.BlockSpec((8, HIDDEN), lambda i: (0, 0)),        # bn0 stats
                pl.BlockSpec((tile_m, ap), lambda i: (i, 0)),       # action tile
                pl.BlockSpec((g, tile_m), lambda i: (0, i)),        # pool columns
                pl.BlockSpec((HIDDEN, HIDDEN), lambda i: (0, 0)),   # w1
                pl.BlockSpec((ap, HIDDEN), lambda i: (0, 0)),       # w2
                pl.BlockSpec((2, HIDDEN), lambda i: (0, 0)),        # w3 pack
                pl.BlockSpec((8, HIDDEN), lambda i: (0, 0)),        # bias pack
            ],
            out_specs=pl.BlockSpec((g, LANE), lambda i: (0, 0)),    # lane-dense q
            scratch_shapes=[pltpu.VMEM((g, HIDDEN), jnp.float32),   # pool @ h1
                            pltpu.VMEM((g, HIDDEN), jnp.float32),   # pool @ h2
                            pltpu.VMEM((8, HIDDEN), jnp.float32)]), # bn1/bn2 stats
        compiler_params=cparams,
    )(b3, h0, stats0, act_p, pool_b, w1, w2, w3_pack, bias_pack)

    return q_full[:, :1]   # column 0 of the lane-dense output holds Q


# ------------------------------ JAX glue --------------------------------------
def build_gcn_adjacency(edge_index, num_nodes):
    # TODO(synk): GCNCell is not defined in the source file; assuming the
    # standard GCN propagation D^{-1/2} (A + I) D^{-1/2}.
    src, dst = edge_index
    A = jnp.zeros((num_nodes, num_nodes), jnp.float32)
    A = A.at[src, dst].set(1.0)
    A = A.at[dst, src].set(1.0)                      # undirected
    A = A + jnp.eye(num_nodes, dtype=jnp.float32)    # self-loops
    deg = jnp.sum(A, axis=1)
    d_inv_sqrt = jax.lax.rsqrt(jnp.maximum(deg, 1.0))
    return A * d_inv_sqrt[:, None] * d_inv_sqrt[None, :]


def build_mean_pool(batch, num_graphs):
    onehot = (batch[None, :] == jnp.arange(num_graphs)[:, None]).astype(jnp.float32)
    counts = jnp.sum(onehot, axis=1, keepdims=True)
    return onehot / jnp.maximum(counts, 1.0)         # (G, N), rows sum to 1


def init_params(key, state_dim, action_dim):
    k = jax.random.split(key, 4)
    # fc weights ~ N(0, 0.1) as in the module; biases zero (deterministic init).
    return {
        "w_gcn": 0.1 * jax.random.normal(k[0], (state_dim, HIDDEN), jnp.float32),
        "b_gcn": jnp.zeros((1, HIDDEN), jnp.float32),
        "w1":    0.1 * jax.random.normal(k[1], (HIDDEN, HIDDEN), jnp.float32),
        "b1":    jnp.zeros((1, HIDDEN), jnp.float32),
        "w2":    0.1 * jax.random.normal(k[2], (action_dim, HIDDEN), jnp.float32),
        "b2":    jnp.zeros((1, HIDDEN), jnp.float32),
        "w3":    0.1 * jax.random.normal(k[3], (2 * HIDDEN, 1), jnp.float32),
        "b3":    jnp.zeros((1, 1), jnp.float32),
    }


def critic_reference(params, x, a_hat, action, pool):
    # Pure-JAX f32 reference of the PyTorch forward (training-mode BN).
    def bn(h):
        m = jnp.mean(h, axis=0, keepdims=True)
        v = jnp.mean((h - m) ** 2, axis=0, keepdims=True)
        return (h - m) * jax.lax.rsqrt(v + BN_EPS)

    h0 = jnp.maximum(a_hat @ (x @ params["w_gcn"]) + params["b_gcn"], 0.0)
    h1 = jnp.maximum(bn(h0) @ params["w1"] + params["b1"], 0.0)
    h2 = jnp.maximum(action @ params["w2"] + params["b2"], 0.0)
    cat = jnp.concatenate([bn(h1), bn(h2)], axis=1)
    return pool @ cat @ params["w3"] + params["b3"]


# ------------------------------ main ------------------------------------------
if __name__ == "__main__":
    state_dim = 16
    action_dim = 8
    nodes_per_graph = 64
    num_graphs = 4
    num_nodes = nodes_per_graph * num_graphs        # 256 nodes -> grid of 2 tiles

    key = jax.random.PRNGKey(0)
    kx, ka, kp = jax.random.split(key, 3)

    x = jax.random.normal(kx, (num_nodes, state_dim), jnp.float32)
    action = jax.random.normal(ka, (num_nodes, action_dim), jnp.float32)

    # simple ring edges within each graph
    src, dst = [], []
    for gi in range(num_graphs):
        base = gi * nodes_per_graph
        for i in range(nodes_per_graph):
            src.append(base + i)
            dst.append(base + (i + 1) % nodes_per_graph)
    edge_index = (jnp.array(src, jnp.int32), jnp.array(dst, jnp.int32))

    batch = jnp.repeat(jnp.arange(num_graphs, dtype=jnp.int32), nodes_per_graph)

    a_hat = build_gcn_adjacency(edge_index, num_nodes)
    pool = build_mean_pool(batch, num_graphs)
    params = init_params(kp, state_dim, action_dim)

    qval = critic_forward(params, x, a_hat, action, pool, tile_m=128)
    jax.block_until_ready(qval)

    assert qval.shape == (num_graphs, 1) and qval.dtype == jnp.float32
    assert bool(jnp.all(jnp.isfinite(qval)))

    q_ref = critic_reference(params, x, a_hat, action, pool)
    assert bool(jnp.allclose(qval, q_ref, rtol=5e-2, atol=5e-2)), (
        "kernel/reference mismatch")

    print("KERNEL_OK")
</pallas_src>

<mosaic_0001>
module attributes {stable_mosaic.version = 11 : i64} {
  func.func @gcn_kernel(%arg0: i32, %arg1: memref<128x256xbf16, #tpu.memory_space<vmem>>, %arg2: memref<256x128xbf16, #tpu.memory_space<vmem>>, %arg3: memref<128x128xbf16, #tpu.memory_space<vmem>>, %arg4: memref<8x128xf32, #tpu.memory_space<vmem>>, %arg5: memref<128x128xf32, #tpu.memory_space<vmem>>, %arg6: memref<8x128xf32, #tpu.memory_space<vmem>>) attributes {dimension_semantics = [#tpu.dimension_semantics<arbitrary>], iteration_bounds = array<i64: 2>, scalar_prefetch = 0 : i64, scratch_operands = 0 : i64, tpu.core_type = #tpu.core_type<tc>, window_params = [{transform_indices = @transform_0, window_bounds = array<i64: 128, 256>}, {pipeline_mode = #tpu.pipeline_mode<synchronous>, transform_indices = @transform_1, window_bounds = array<i64: 256, 128>}, {pipeline_mode = #tpu.pipeline_mode<synchronous>, transform_indices = @transform_2, window_bounds = array<i64: 128, 128>}, {pipeline_mode = #tpu.pipeline_mode<synchronous>, transform_indices = @transform_3, window_bounds = array<i64: 8, 128>}, {transform_indices = @transform_4, window_bounds = array<i64: 128, 128>}, {pipeline_mode = #tpu.pipeline_mode<synchronous>, transform_indices = @transform_5, window_bounds = array<i64: 8, 128>}]} {
    %c0_i32 = arith.constant 0 : i32
    %0 = arith.cmpi eq, %arg0, %c0_i32 : i32
    %1 = arith.extui %0 : i1 to i32
    %c0_i32_0 = arith.constant 0 : i32
    %2 = arith.cmpi ne, %1, %c0_i32_0 : i32
    scf.if %2 {
      %cst_19 = arith.constant 0.000000e+00 : f32
      %25 = vector.broadcast %cst_19 : f32 to vector<8x128xf32>
      %c0_20 = arith.constant 0 : index
      %c0_21 = arith.constant 0 : index
      %26 = vector.load %arg6[%c0_20, %c0_21] : memref<8x128xf32, #tpu.memory_space<vmem>>, vector<8x128xf32>
      tpu.vector_store %arg6[%c0_20, %c0_21], %25 {strides = array<i32>} : memref<8x128xf32, #tpu.memory_space<vmem>>, vector<8x128xf32>,
    } else {
    }
    %c0 = arith.constant 0 : index
    %c0_1 = arith.constant 0 : index
    %3 = vector.load %arg1[%c0, %c0_1] : memref<128x256xbf16, #tpu.memory_space<vmem>>, vector<128x256xbf16>
    %c0_2 = arith.constant 0 : index
    %c0_3 = arith.constant 0 : index
    %4 = vector.load %arg2[%c0_2, %c0_3] : memref<256x128xbf16, #tpu.memory_space<vmem>>, vector<256x128xbf16>
    %cst = arith.constant dense<0.000000e+00> : vector<128x128xf32>
    %5 = tpu.matmul %3, %4, %cst {dimension_numbers = #tpu.dot_dimension_numbers<[1], [0], [0], [1], [0, 0, 1, 1], [], []>} : vector<128x256xbf16>, vector<256x128xbf16>, vector<128x128xf32> -> vector<128x128xf32>
    %6 = arith.truncf %5 : vector<128x128xf32> to vector<128x128xbf16>
    %c0_4 = arith.constant 0 : index
    %c0_5 = arith.constant 0 : index
    %7 = vector.load %arg3[%c0_4, %c0_5] : memref<128x128xbf16, #tpu.memory_space<vmem>>, vector<128x128xbf16>
    %cst_6 = arith.constant dense<0.000000e+00> : vector<128x128xf32>
    %8 = tpu.matmul %6, %7, %cst_6 {dimension_numbers = #tpu.dot_dimension_numbers<[1], [0], [0], [1], [0, 0, 1, 1], [], []>} : vector<128x128xbf16>, vector<128x128xbf16>, vector<128x128xf32> -> vector<128x128xf32>
    %c0_7 = arith.constant 0 : index
    %c0_8 = arith.constant 0 : index
    %9 = vector.load %arg4[%c0_7, %c0_8] : memref<8x128xf32, #tpu.memory_space<vmem>>, vector<1x128xf32>
    %10 = vector.broadcast %9 : vector<1x128xf32> to vector<128x128xf32>
    %11 = arith.addf %8, %10 : vector<128x128xf32>
    %cst_9 = arith.constant 0.000000e+00 : f32
    %12 = vector.broadcast %cst_9 : f32 to vector<128x128xf32>
    %13 = arith.maximumf %11, %12 : vector<128x128xf32>
    %c0_10 = arith.constant 0 : index
    %c0_11 = arith.constant 0 : index
    %14 = vector.load %arg5[%c0_10, %c0_11] : memref<128x128xf32, #tpu.memory_space<vmem>>, vector<128x128xf32>
    tpu.vector_store %arg5[%c0_10, %c0_11], %13 {strides = array<i32>} : memref<128x128xf32, #tpu.memory_space<vmem>>, vector<128x128xf32>,
    %cst_12 = arith.constant dense<0.000000e+00> : vector<128xf32>
    %15 = vector.multi_reduction <add>, %13, %cst_12 [0] : vector<128x128xf32> to vector<128xf32>
    %16 = vector.shape_cast %15 : vector<128xf32> to vector<1x128xf32>
    %17 = arith.mulf %13, %13 : vector<128x128xf32>
    %cst_13 = arith.constant dense<0.000000e+00> : vector<128xf32>
    %18 = vector.multi_reduction <add>, %17, %cst_13 [0] : vector<128x128xf32> to vector<128xf32>
    %19 = vector.shape_cast %18 : vector<128xf32> to vector<1x128xf32>
    %c0_14 = arith.constant 0 : index
    %c0_15 = arith.constant 0 : index
    %20 = vector.load %arg6[%c0_14, %c0_15] : memref<8x128xf32, #tpu.memory_space<vmem>>, vector<8x128xf32>
    %cst_16 = arith.constant 0.000000e+00 : f32
    %21 = vector.broadcast %cst_16 : f32 to vector<6x128xf32>
    %22 = tpu.concatenate %16, %19, %21 in 0 : vector<1x128xf32>, vector<1x128xf32>, vector<6x128xf32> -> vector<8x128xf32>
    %23 = arith.addf %20, %22 : vector<8x128xf32>
    %c0_17 = arith.constant 0 : index
    %c0_18 = arith.constant 0 : index
    %24 = vector.load %arg6[%c0_17, %c0_18] : memref<8x128xf32, #tpu.memory_space<vmem>>, vector<8x128xf32>
    tpu.vector_store %arg6[%c0_17, %c0_18], %23 {strides = array<i32>} : memref<8x128xf32, #tpu.memory_space<vmem>>, vector<8x128xf32>,
    return
  }
  func.func @transform_0(%arg0: i32) -> (i32, i32) {
    %c0_i32 = arith.constant 0 : i32
    %c0_i32_0 = arith.constant 0 : i32
    return %arg0, %c0_i32 : i32, i32
  }
  func.func @transform_1(%arg0: i32) -> (i32, i32) {
    %c0_i32 = arith.constant 0 : i32
    %c0_i32_0 = arith.constant 0 : i32
    %c0_i32_1 = arith.constant 0 : i32
    return %c0_i32, %c0_i32_0 : i32, i32
  }
  func.func @transform_2(%arg0: i32) -> (i32, i32) {
    %c0_i32 = arith.constant 0 : i32
    %c0_i32_0 = arith.constant 0 : i32
    %c0_i32_1 = arith.constant 0 : i32
    return %c0_i32, %c0_i32_0 : i32, i32
  }
  func.func @transform_3(%arg0: i32) -> (i32, i32) {
    %c0_i32 = arith.constant 0 : i32
    %c0_i32_0 = arith.constant 0 : i32
    %c0_i32_1 = arith.constant 0 : i32
    return %c0_i32, %c0_i32_0 : i32, i32
  }
  func.func @transform_4(%arg0: i32) -> (i32, i32) {
    %c0_i32 = arith.constant 0 : i32
    %c0_i32_0 = arith.constant 0 : i32
    return %arg0, %c0_i32 : i32, i32
  }
  func.func @transform_5(%arg0: i32) -> (i32, i32) {
    %c0_i32 = arith.constant 0 : i32
    %c0_i32_0 = arith.constant 0 : i32
    %c0_i32_1 = arith.constant 0 : i32
    return %c0_i32, %c0_i32_0 : i32, i32
  }
}

</mosaic_0001>

<llo_original>
// kernel: tpu_custom_call.1
$region0: #{tpu_custom_call.1}
  #allocation0 [shape = 'u32[]', space=smem, size = 0x4, offset = 0x4, fixed_abs, tag = 'smem constant byte address 0x4 - core index']
  #allocation1 [shape = 'u32[144,128]{1,0:T(1,128)}', space=vmem, size = 0x12000, scoped, tag = 'internal scratch']
  %s0 = inlined_call_operand.hbm [shape: bf16[256,256], index: 0, kind: input, shape index: {}]
  %s1 = inlined_call_operand.hbm [shape: bf16[256,128], index: 1, kind: input, shape index: {}]
  %s2 = inlined_call_operand.hbm [shape: bf16[128,128], index: 2, kind: input, shape index: {}]
  %s3 = inlined_call_operand.vmem [shape: f32[8,128], index: 3, kind: input, shape index: {}]
  %s4 = inlined_call_operand.hbm [shape: f32[256,128], index: 4, kind: output, shape index: {0}]
  %s5 = inlined_call_operand.hbm [shape: f32[8,128], index: 5, kind: output, shape index: {1}]
  %6 = xla_tuple %s4, %s5
  %s7 = sld [smem:[#allocation0]]
  $region73: #{tpu_custom_call.1} parent=0
    _
  %s9 = ssub.s32 1, %s7
  %s10 = scalar_select 0, %s9, %s7
  $region1: #{tpu_custom_call.1} parent=0
    #allocation2 [shape = 'u8[131072]{0}', space=vmem, size = 0x20000, scoped, tag = 'input window, operand 0']
    #allocation3 [shape = 's32[2]{0}', space=sflag, size = 0x8, scoped, tag = 'scoped memory for tpu_custom_call.1']
    #allocation4 [shape = 's32[2]{0}', space=sflag, size = 0x8, scoped, tag = 'scoped memory for tpu_custom_call.1']
    #allocation5 [shape = 'u8[65536]{0}', space=vmem, size = 0x10000, scoped, tag = 'input window, operand 1, single buffered']
    #allocation6 [shape = 's32[1]{0}', space=sflag, size = 0x4, scoped, tag = 'scoped memory for tpu_custom_call.1']
    #allocation7 [shape = 'u8[32768]{0}', space=vmem, size = 0x8000, scoped, tag = 'input window, operand 2, single buffered']
    #allocation8 [shape = 'u8[131072]{0}', space=vmem, size = 0x20000, scoped, tag = 'output window, operand 0']
    #allocation9 [shape = 'u8[4096]{0}', space=vmem, size = 0x1000, scoped, tag = 'output window, operand 1, single buffered']
    #allocation10 [shape = 's32[1]{0}', space=sflag, size = 0x4, scoped, tag = 'scoped memory for tpu_custom_call.1']
    %11 = vsyncpa [#allocation3], 0
    %s12 = scalar_lea.sflag [#allocation3], 1
    %13 = vsyncpa %s12, 0
    %14 = vsyncpa [#allocation6], 0
    %15 = vsyncpa [#allocation4], 0
    %s16 = scalar_lea.sflag [#allocation4], 1
    %17 = vsyncpa %s16, 0
    %18 = vsyncpa [#allocation10], 0
    loop: start=0, step=1, limit=4
    $region2: #{tpu_custom_call.1} parent=1 // loop_pre_header
      _
    $region3: #{tpu_custom_call.1} parent=1 // loop_header
      %s20 = sphi 0, %s24
      %p21 = scmp.ge.s32.totalorder %s20, 4
      %s30 = sphi 0, %s32
      %s33 = sphi 0, %s30
      %s34 = sphi 0, %s33
      %s50 = sphi 0, %s34
      %s54 = sphi 0, %s54
      %s56 = sphi 0, %s54
      %s57 = sphi 0, %s56
      %s71 = sphi 0, %s57
      %s75 = sphi 0, %s75
      %s77 = sphi 0, %s75
      %s78 = sphi 0, %s77
      %s92 = sphi 0, %s78
      %s96 = sphi 0, %s96
      %s98 = sphi 0, %s96
      %s99 = sphi 0, %s98
      %s113 = sphi 0, %s99
      %s119 = sphi 0, %s121
      %s122 = sphi 0, %s119
      %s123 = sphi 0, %s122
      %s139 = sphi 0, %s123
      %s143 = sphi 0, %s143
      %s145 = sphi 0, %s143
      %s146 = sphi 0, %s145
      %s160 = sphi 0, %s146
    $region4: #{tpu_custom_call.1} parent=1 // loop_header_branch
      %23 = sbr.rel (%p21) target = $region8
    $region5: #{tpu_custom_call.1} parent=1 // loop_body
      %s25 = ssub.s32 %s20, 1
      %s26 = ssub.s32 %s20, 2
      %s27 = sadd.s32 %s20, 1
      %s28 = ssub.s32 %s20, %s27
      %p29 = scmp.eq.s32.totalorder %s28, 0
      %s31 = sadd.s32 %s30, 1
      %s32 = scalar_select %p29, %s30, %s31
      %p35 = pneg %p29
      %p36 = scmp.eq.s32.totalorder %s20, 1
      %p37 = por %p35, %p36
      %p38 = scmp.ne.s32.totalorder %s30, %s33
      %p39 = scmp.eq.s32.totalorder %s20, 0
      %p40 = por %p38, %p39
      %p41 = scmp.ne.s32.totalorder %s30, %s33
      %p42 = scmp.eq.s32.totalorder %s25, 1
      %p43 = por %p41, %p42
      %p44 = scmp.ne.s32.totalorder %s33, %s34
      %p45 = scmp.eq.s32.totalorder %s25, 0
      %p46 = por %p44, %p45
      %p47 = scmp.ne.s32.totalorder %s33, %s34
      %p48 = scmp.eq.s32.totalorder %s26, 1
      %p49 = por %p47, %p48
      %p51 = scmp.ne.s32.totalorder %s34, %s50
      %p52 = scmp.eq.s32.totalorder %s26, 0
      %p53 = por %p51, %p52
      %s55 = sadd.s32 %s54, 1
      %p58 = scmp.eq.s32.totalorder %s20, 1
      %p59 = scmp.ne.s32.totalorder %s54, %s56
      %p60 = scmp.eq.s32.totalorder %s20, 0
      %p61 = por %p59, %p60
      %p62 = scmp.ne.s32.totalorder %s54, %s56
      %p63 = scmp.eq.s32.totalorder %s25, 1
      %p64 = por %p62, %p63
      %p65 = scmp.ne.s32.totalorder %s56, %s57
      %p66 = scmp.eq.s32.totalorder %s25, 0
      %p67 = por %p65, %p66
      %p68 = scmp.ne.s32.totalorder %s56, %s57
      %p69 = scmp.eq.s32.totalorder %s26, 1
      %p70 = por %p68, %p69
      %p72 = scmp.ne.s32.totalorder %s57, %s71
      %p73 = scmp.eq.s32.totalorder %s26, 0
      %p74 = por %p72, %p73
      %s76 = sadd.s32 %s75, 1
      %p79 = scmp.eq.s32.totalorder %s20, 1
      %p80 = scmp.ne.s32.totalorder %s75, %s77
      %p81 = scmp.eq.s32.totalorder %s20, 0
      %p82 = por %p80, %p81
      %p83 = scmp.ne.s32.totalorder %s75, %s77
      %p84 = scmp.eq.s32.totalorder %s25, 1
      %p85 = por %p83, %p84
      %p86 = scmp.ne.s32.totalorder %s77, %s78
      %p87 = scmp.eq.s32.totalorder %s25, 0
      %p88 = por %p86, %p87
      %p89 = scmp.ne.s32.totalorder %s77, %s78
      %p90 = scmp.eq.s32.totalorder %s26, 1
      %p91 = por %p89, %p90
      %p93 = scmp.ne.s32.totalorder %s78, %s92
      %p94 = scmp.eq.s32.totalorder %s26, 0
      %p95 = por %p93, %p94
      %s97 = sadd.s32 %s96, 1
      %p100 = scmp.eq.s32.totalorder %s20, 1
      %p101 = scmp.ne.s32.totalorder %s96, %s98
      %p102 = scmp.eq.s32.totalorder %s20, 0
      %p103 = por %p101, %p102
      %p104 = scmp.ne.s32.totalorder %s96, %s98
      %p105 = scmp.eq.s32.totalorder %s25, 1
      %p106 = por %p104, %p105
      %p107 = scmp.ne.s32.totalorder %s98, %s99
      %p108 = scmp.eq.s32.totalorder %s25, 0
      %p109 = por %p107, %p108
      %p110 = scmp.ne.s32.totalorder %s98, %s99
      %p111 = scmp.eq.s32.totalorder %s26, 1
      %p112 = por %p110, %p111
      %p114 = scmp.ne.s32.totalorder %s99, %s113
      %p115 = scmp.eq.s32.totalorder %s26, 0
      %p116 = por %p114, %p115
      %s117 = ssub.s32 %s20, %s27
      %p118 = scmp.eq.s32.totalorder %s117, 0
      %s120 = sadd.s32 %s119, 1
      %s121 = scalar_select %p118, %s119, %s120
      %p124 = pneg %p118
      %p125 = scmp.eq.s32.totalorder %s20, 1
      %p126 = por %p124, %p125
      %p127 = scmp.ne.s32.totalorder %s119, %s122
      %p128 = scmp.eq.s32.totalorder %s20, 0
      %p129 = por %p127, %p128
      %p130 = scmp.ne.s32.totalorder %s119, %s122
      %p131 = scmp.eq.s32.totalorder %s25, 1
      %p132 = por %p130, %p131
      %p133 = scmp.ne.s32.totalorder %s122, %s123
      %p134 = scmp.eq.s32.totalorder %s25, 0
      %p135 = por %p133, %p134
      %p136 = scmp.ne.s32.totalorder %s122, %s123
      %p137 = scmp.eq.s32.totalorder %s26, 1
      %p138 = por %p136, %p137
      %p140 = scmp.ne.s32.totalorder %s123, %s139
      %p141 = scmp.eq.s32.totalorder %s26, 0
      %p142 = por %p140, %p141
      %s144 = sadd.s32 %s143, 1
      %p147 = scmp.eq.s32.totalorder %s20, 1
      %p148 = scmp.ne.s32.totalorder %s143, %s145
      %p149 = scmp.eq.s32.totalorder %s20, 0
      %p150 = por %p148, %p149
      %p151 = scmp.ne.s32.totalorder %s143, %s145
      %p152 = scmp.eq.s32.totalorder %s25, 1
      %p153 = por %p151, %p152
      %p154 = scmp.ne.s32.totalorder %s145, %s146
      %p155 = scmp.eq.s32.totalorder %s25, 0
      %p156 = por %p154, %p155
      %p157 = scmp.ne.s32.totalorder %s145, %s146
      %p158 = scmp.eq.s32.totalorder %s26, 1
      %p159 = por %p157, %p158
      %p161 = scmp.ne.s32.totalorder %s146, %s160
      %p162 = scmp.eq.s32.totalorder %s26, 0
      %p163 = por %p161, %p162
      %p164 = scmp.le.s32.totalorder 1, %s20
      %p165 = scmp.lt.s32.totalorder %s20, 3
      %p166 = pnand %p164, %p165
      %p167 = pneg %p166
      // Predicated region
      $region9: #{tpu_custom_call.1} parent=5 // pred_check
        _
      $region10: #{tpu_custom_call.1} parent=5 // pred_check_branch
        %169 = sbr.rel (%p166) target = $region12
      $region11: #{tpu_custom_call.1} parent=5 // pred_region
        %s170 = ssub.s32 %s20, 1
        // Predicated region
        $region13: #{tpu_custom_call.1} parent=11 // pred_check
          %p171 = pneg %p67
        $region14: #{tpu_custom_call.1} parent=11 // pred_check_branch
          %173 = sbr.rel (%p171) target = $region16
        $region15: #{tpu_custom_call.1} parent=11 // pred_region
          %s175 = ssub.s32 2048, 2048
          %176 = vsyncadd [#allocation6], %s175
          %s177 = sshll.u32 [#allocation5], 4
          %s178 = int_to_ptr.vmem [resolvable:$true] %s177
          %183 = dma.hbm_to_vmem [thread:$0]  %s1, 2048, %s178, [#allocation6], 64, 64, 4
        $region16: #{tpu_custom_call.1} parent=11 // pred_fallthru
          _
        // Predicated region
        $region17: #{tpu_custom_call.1} parent=11 // pred_check
          %p184 = pneg %p88
        $region18: #{tpu_custom_call.1} parent=11 // pred_check_branch
          %186 = sbr.rel (%p184) target = $region20
        $region19: #{tpu_custom_call.1} parent=11 // pred_region
          %s188 = ssub.s32 1024, 1024
          %189 = vsyncadd [#allocation6], %s188
          %s190 = sshll.u32 [#allocation7], 4
          %s191 = int_to_ptr.vmem [resolvable:$true] %s190
          %196 = dma.hbm_to_vmem [thread:$0]  %s2, 1024, %s191, [#allocation6], 64, 64, 4
        $region20: #{tpu_custom_call.1} parent=11 // pred_fallthru
          _
        // Predicated region
        $region21: #{tpu_custom_call.1} parent=11 // pred_check
          %p197 = pneg %p109
        $region22: #{tpu_custom_call.1} parent=11 // pred_check_branch
          %199 = sbr.rel (%p197) target = $region24
        $region23: #{tpu_custom_call.1} parent=11 // pred_region
          _
        $region24: #{tpu_custom_call.1} parent=11 // pred_fallthru
          _
      $region12: #{tpu_custom_call.1} parent=5 // pred_fallthru
        _
      %p200 = scmp.lt.s32.totalorder %s20, 2
      // Predicated region
      $region25: #{tpu_custom_call.1} parent=5 // pred_check
        %p201 = pneg %p200
      $region26: #{tpu_custom_call.1} parent=5 // pred_check_branch
        %203 = sbr.rel (%p201) target = $region28
      $region27: #{tpu_custom_call.1} parent=5 // pred_region
        // Predicated region
        $region29: #{tpu_custom_call.1} parent=27 // pred_check
          %p204 = pneg %p40
        $region30: #{tpu_custom_call.1} parent=27 // pred_check_branch
          %206 = sbr.rel (%p204) target = $region32
        $region31: #{tpu_custom_call.1} parent=27 // pred_region
          %s207 = sand.u32 %s30, 1
          %s208 = scalar_lea.sflag [#allocation3], %s207
          %s209 = sand.u32 %s30, 1
          %s210 = smul.addr %s209, 128
          %s211 = scalar_lea.vmem [#allocation2], %s210
          %s212 = smul.u32 16, %s20
          %s214 = ssub.s32 2048, 2048
          %215 = vsyncadd %s208, %s214
          %s216 = smul.addr %s212, 2
          %s217 = smul.addr %s216, 64
          %s218 = scalar_lea.hbm %s0, %s217
          %s219 = sshll.u32 %s211, 4
          %s220 = int_to_ptr.vmem [resolvable:$true] %s219
          %225 = dma.hbm_to_vmem [thread:$0]  %s218, 2048, %s220, %s208, 128, 128, 8
        $region32: #{tpu_custom_call.1} parent=27 // pred_fallthru
          _
      $region28: #{tpu_custom_call.1} parent=5 // pred_fallthru
        _
      %p226 = scmp.le.s32.totalorder 1, %s20
      %p227 = scmp.lt.s32.totalorder %s20, 3
      %p228 = pnand %p226, %p227
      %p229 = pneg %p228
      // Predicated region
      $region33: #{tpu_custom_call.1} parent=5 // pred_check
        _
      $region34: #{tpu_custom_call.1} parent=5 // pred_check_branch
        %231 = sbr.rel (%p228) target = $region36
      $region35: #{tpu_custom_call.1} parent=5 // pred_region
        %s232 = ssub.s32 %s20, 1
        %s233 = sand.u32 %s33, 1
        %s234 = scalar_lea.sflag [#allocation3], %s233
        %s235 = sand.u32 %s33, 1
        %s236 = smul.addr %s235, 128
        %s237 = scalar_lea.vmem [#allocation2], %s236
        // Predicated region
        $region37: #{tpu_custom_call.1} parent=35 // pred_check
          %p238 = pneg %p46
        $region38: #{tpu_custom_call.1} parent=35 // pred_check_branch
          %240 = sbr.rel (%p238) target = $region40
        $region39: #{tpu_custom_call.1} parent=35 // pred_region
          %241 = dma.done %s234, 2048
        $region40: #{tpu_custom_call.1} parent=35 // pred_fallthru
          _
        // Predicated region
        $region41: #{tpu_custom_call.1} parent=35 // pred_check
          %p242 = pneg %p67
        $region42: #{tpu_custom_call.1} parent=35 // pred_check_branch
          %244 = sbr.rel (%p242) target = $region44
        $region43: #{tpu_custom_call.1} parent=35 // pred_region
          %245 = dma.done [#allocation6], 2048
        $region44: #{tpu_custom_call.1} parent=35 // pred_fallthru
          _
        // Predicated region
        $region45: #{tpu_custom_call.1} parent=35 // pred_check
          %p246 = pneg %p88
        $region46: #{tpu_custom_call.1} parent=35 // pred_check_branch
          %248 = sbr.rel (%p246) target = $region48
        $region47: #{tpu_custom_call.1} parent=35 // pred_region
          %249 = dma.done [#allocation6], 1024
        $region48: #{tpu_custom_call.1} parent=35 // pred_fallthru
          _
        %s250 = sand.u32 %s33, 1
        %s251 = scalar_lea.sflag [#allocation3], %s250
        %s252 = sand.u32 %s33, 1
        %s253 = smul.addr %s252, 128
        %s254 = scalar_lea.vmem [#allocation2], %s253
        %p255 = pneg %p46
        %p256 = pneg %p43
        %p257 = pneg %p67
        %p258 = pneg %p64
        %p259 = pneg %p88
        %p260 = pneg %p85
        %p261 = pneg %p109
        %p262 = pneg %p106
        %p263 = pneg %p135
        %p264 = pneg %p132
        %s265 = sand.u32 %s122, 1
        %s266 = scalar_lea.sflag [#allocation4], %s265
        %s267 = sand.u32 %s122, 1
        %s268 = smul.addr %s267, 128
        %s269 = scalar_lea.vmem [#allocation8], %s268
        %p270 = pneg %p156
        %p271 = pneg %p153
        %s272 = smul.u32 16, %s25
        %s273 = smul.u32 16, %s25
        %p275 = scmp.eq.s32.totalorder %s25, 0
        // Predicated region
        $region49: #{tpu_custom_call.1} parent=35 // pred_check
          %p276 = pneg %p275
        $region50: #{tpu_custom_call.1} parent=35 // pred_check_branch
          %278 = sbr.rel (%p276) target = $region52
        $region51: #{tpu_custom_call.1} parent=35 // pred_region
          %279 = vst [vmem:[#allocation9] sm:$0xff] 0.0
        $region52: #{tpu_custom_call.1} parent=35 // pred_fallthru
          _
        %v280 = vld [vmem:[%s237] sm:$0xff]
        %v281 = vld [vmem:[%s237 + $0x8] sm:$0xff]
        %v282 = vld [vmem:[%s237 + $0x10] sm:$0xff]
        %v283 = vld [vmem:[%s237 + $0x18] sm:$0xff]
        %v284 = vld [vmem:[%s237 + $0x20] sm:$0xff]
        %v285 = vld [vmem:[%s237 + $0x28] sm:$0xff]
        %v286 = vld [vmem:[%s237 + $0x30] sm:$0xff]
        %v287 = vld [vmem:[%s237 + $0x38] sm:$0xff]
        %v288 = vld [vmem:[%s237 + $0x40] sm:$0xff]
        %v289 = vld [vmem:[%s237 + $0x48] sm:$0xff]
        %v290 = vld [vmem:[%s237 + $0x50] sm:$0xff]
        %v291 = vld [vmem:[%s237 + $0x58] sm:$0xff]
        %v292 = vld [vmem:[%s237 + $0x60] sm:$0xff]
        %v293 = vld [vmem:[%s237 + $0x68] sm:$0xff]
        %v294 = vld [vmem:[%s237 + $0x70] sm:$0xff]
        %v295 = vld [vmem:[%s237 + $0x78] sm:$0xff]
        %v296 = vld [vmem:[#allocation5] sm:$0xf]
        %v297 = vld [vmem:[#allocation5 + $0x4] sm:$0xf]
        %v298 = vld [vmem:[#allocation5 + $0x8] sm:$0xf]
        %v299 = vld [vmem:[#allocation5 + $0xc] sm:$0xf]
        %v300 = vld [vmem:[#allocation5 + $0x10] sm:$0xf]
        %v301 = vld [vmem:[#allocation5 + $0x14] sm:$0xf]
        %v302 = vld [vmem:[#allocation5 + $0x18] sm:$0xf]
        %v303 = vld [vmem:[#allocation5 + $0x1c] sm:$0xf]
        %v304 = vld [vmem:[#allocation5 + $0x20] sm:$0xf]
        %v305 = vld [vmem:[#allocation5 + $0x24] sm:$0xf]
        %v306 = vld [vmem:[#allocation5 + $0x28] sm:$0xf]
        %v307 = vld [vmem:[#allocation5 + $0x2c] sm:$0xf]
        %v308 = vld [vmem:[#allocation5 + $0x30] sm:$0xf]
        %v309 = vld [vmem:[#allocation5 + $0x34] sm:$0xf]
        %v310 = vld [vmem:[#allocation5 + $0x38] sm:$0xf]
        %v311 = vld [vmem:[#allocation5 + $0x3c] sm:$0xf]
        %v312 = vld [vmem:[#allocation5 + $0x40] sm:$0xf]
        %v313 = vld [vmem:[#allocation5 + $0x44] sm:$0xf]
        %v314 = vld [vmem:[#allocation5 + $0x48] sm:$0xf]
        %v315 = vld [vmem:[#allocation5 + $0x4c] sm:$0xf]
        %v316 = vld [vmem:[#allocation5 + $0x50] sm:$0xf]
        %v317 = vld [vmem:[#allocation5 + $0x54] sm:$0xf]
        %v318 = vld [vmem:[#allocation5 + $0x58] sm:$0xf]
        %v319 = vld [vmem:[#allocation5 + $0x5c] sm:$0xf]
        %v320 = vld [vmem:[#allocation5 + $0x60] sm:$0xf]
        %v321 = vld [vmem:[#allocation5 + $0x64] sm:$0xf]
        %v322 = vld [vmem:[#allocation5 + $0x68] sm:$0xf]
        %v323 = vld [vmem:[#allocation5 + $0x6c] sm:$0xf]
        %v324 = vld [vmem:[#allocation5 + $0x70] sm:$0xf]
        %v325 = vld [vmem:[#allocation5 + $0x74] sm:$0xf]
        %v326 = vld [vmem:[#allocation5 + $0x78] sm:$0xf]
        %v327 = vld [vmem:[#allocation5 + $0x7c] sm:$0xf]
        %v344 = vunpack.c.l.b16 %v280
        %v345 = vunpack.c.h.b16 %v280
        %v346 = vunpack.c.l.b16 %v281
        %v347 = vunpack.c.h.b16 %v281
        %v348 = vunpack.c.l.b16 %v282
        %v349 = vunpack.c.h.b16 %v282
        %v350 = vunpack.c.l.b16 %v283
        %v351 = vunpack.c.h.b16 %v283
        %v352 = vunpack.c.l.b16 %v284
        %v353 = vunpack.c.h.b16 %v284
        %v354 = vunpack.c.l.b16 %v285
        %v355 = vunpack.c.h.b16 %v285
        %v356 = vunpack.c.l.b16 %v286
        %v357 = vunpack.c.h.b16 %v286
        %v358 = vunpack.c.l.b16 %v287
        %v359 = vunpack.c.h.b16 %v287
        %v360 = vunpack.c.l.b16 %v288
        %v361 = vunpack.c.h.b16 %v288
        %v362 = vunpack.c.l.b16 %v289
        %v363 = vunpack.c.h.b16 %v289
        %v364 = vunpack.c.l.b16 %v290
        %v365 = vunpack.c.h.b16 %v290
        %v366 = vunpack.c.l.b16 %v291
        %v367 = vunpack.c.h.b16 %v291
        %v368 = vunpack.c.l.b16 %v292
        %v369 = vunpack.c.h.b16 %v292
        %v370 = vunpack.c.l.b16 %v293
        %v371 = vunpack.c.h.b16 %v293
        %v372 = vunpack.c.l.b16 %v294
        %v373 = vunpack.c.h.b16 %v294
        %v374 = vunpack.c.l.b16 %v295
        %v375 = vunpack.c.h.b16 %v295
        %v376 = vpack.c.b16 %v346, %v344
        %v377 = vpack.c.b16 %v347, %v345
        %v378 = vpack.c.b16 %v350, %v348
        %v379 = vpack.c.b16 %v351, %v349
        %v380 = vpack.c.b16 %v354, %v352
        %v381 = vpack.c.b16 %v355, %v353
        %v382 = vpack.c.b16 %v358, %v356
        %v383 = vpack.c.b16 %v359, %v357
        %v384 = vpack.c.b16 %v362, %v360
        %v385 = vpack.c.b16 %v363, %v361
        %v386 = vpack.c.b16 %v366, %v364
        %v387 = vpack.c.b16 %v367, %v365
        %v388 = vpack.c.b16 %v370, %v368
        %v389 = vpack.c.b16 %v371, %v369
        %v390 = vpack.c.b16 %v374, %v372
        %v391 = vpack.c.b16 %v375, %v373
        %v440 = vunpack.c.l.b16 %v296
        %v441 = vunpack.c.l.b16 %v297
        %v442 = vunpack.c.l.b16 %v298
        %v443 = vunpack.c.l.b16 %v299
        %v444 = vunpack.c.l.b16 %v300
        %v445 = vunpack.c.l.b16 %v301
        %v446 = vunpack.c.l.b16 %v302
        %v447 = vunpack.c.l.b16 %v303
        %v448 = vunpack.c.l.b16 %v304
        %v449 = vunpack.c.l.b16 %v305
        %v450 = vunpack.c.l.b16 %v306
        %v451 = vunpack.c.l.b16 %v307
        %v452 = vunpack.c.l.b16 %v308
        %v453 = vunpack.c.l.b16 %v309
        %v454 = vunpack.c.l.b16 %v310
        %v455 = vunpack.c.l.b16 %v311
        %v456 = vunpack.c.l.b16 %v312
        %v457 = vunpack.c.l.b16 %v313
        %v458 = vunpack.c.l.b16 %v314
        %v459 = vunpack.c.l.b16 %v315
        %v460 = vunpack.c.l.b16 %v316
        %v461 = vunpack.c.l.b16 %v317
        %v462 = vunpack.c.l.b16 %v318
        %v463 = vunpack.c.l.b16 %v319
        %v464 = vunpack.c.l.b16 %v320
        %v465 = vunpack.c.l.b16 %v321
        %v466 = vunpack.c.l.b16 %v322
        %v467 = vunpack.c.l.b16 %v323
        %v468 = vunpack.c.l.b16 %v324
        %v469 = vunpack.c.l.b16 %v325
        %v470 = vunpack.c.l.b16 %v326
        %v471 = vunpack.c.l.b16 %v327
        %v472 = vpack.c.b16 %v441, %v440
        %v473 = vpack.c.b16 %v443, %v442
        %v474 = vpack.c.b16 %v445, %v444
        %v475 = vpack.c.b16 %v447, %v446
        %v476 = vpack.c.b16 %v449, %v448
        %v477 = vpack.c.b16 %v451, %v450
        %v478 = vpack.c.b16 %v453, %v452
        %v479 = vpack.c.b16 %v455, %v454
        %v480 = vpack.c.b16 %v457, %v456
        %v481 = vpack.c.b16 %v459, %v458
        %v482 = vpack.c.b16 %v461, %v460
        %v483 = vpack.c.b16 %v463, %v462
        %v484 = vpack.c.b16 %v465, %v464
        %v485 = vpack.c.b16 %v467, %v466
        %v486 = vpack.c.b16 %v469, %v468
        %v487 = vpack.c.b16 %v471, %v470
        %504 = vmatprep.subr.bf16.mxu0 0
        %505 = vmatpush1.bf16.msra.mxu0 %v472
        %506 = vmatprep.subr.bf16.mxu0 0
        %507 = vmatpush1.bf16.msra.mxu0 %v473
        %508 = vmatprep.subr.bf16.mxu0 0
        %509 = vmatpush1.bf16.msra.mxu0 %v474
        %510 = vmatprep.subr.bf16.mxu0 0
        %511 = vmatpush1.bf16.msra.mxu0 %v475
        %512 = vmatprep.subr.bf16.mxu0 0
        %513 = vmatpush1.bf16.msra.mxu0 %v476
        %514 = vmatprep.subr.bf16.mxu0 0
        %515 = vmatpush1.bf16.msra.mxu0 %v477
        %516 = vmatprep.subr.bf16.mxu0 0
        %517 = vmatpush1.bf16.msra.mxu0 %v478
        %518 = vmatprep.subr.bf16.mxu0 0
        %519 = vmatpush1.bf16.msra.mxu0 %v479
        %520 = vmatprep.subr.bf16.mxu0 0
        %521 = vmatpush1.bf16.msra.mxu0 %v480
        %522 = vmatprep.subr.bf16.mxu0 0
        %523 = vmatpush1.bf16.msra.mxu0 %v481
        %524 = vmatprep.subr.bf16.mxu0 0
        %525 = vmatpush1.bf16.msra.mxu0 %v482
        %526 = vmatprep.subr.bf16.mxu0 0
        %527 = vmatpush1.bf16.msra.mxu0 %v483
        %528 = vmatprep.subr.bf16.mxu0 0
        %529 = vmatpush1.bf16.msra.mxu0 %v484
        %530 = vmatprep.subr.bf16.mxu0 0
        %531 = vmatpush1.bf16.msra.mxu0 %v485
        %532 = vmatprep.subr.bf16.mxu0 0
        %533 = vmatpush1.bf16.msra.mxu0 %v486
        %534 = vmatprep.subr.bf16.mxu0 0
        %535 = vmatpush1.bf16.msra.mxu0 %v487
        %536 = vmatprep.mubr.bf16.mxu0 %v377
        %537 = vmatmul.mubr.bf16.gmra.mrb[0].mxu0 %v376
        %v538 = vpop.f32.mrb[0].mxu0
        %v539 = vadd.f32 0.0, %v538
        %v540 = vpop.f32.mrb[0].mxu0
        %v541 = vpop.f32.mrb[0].mxu0
        %v542 = vadd.f32 0.0, %v541
        %v543 = vpop.f32.mrb[0].mxu0
        %544 = vmatprep.mubr.bf16.mxu0 %v379
        %545 = vmatmul.mubr.bf16.gmra.mrb[0].mxu0 %v378
        %v546 = vpop.f32.mrb[0].mxu0
        %v547 = vadd.f32 0.0, %v546
        %v548 = vpop.f32.mrb[0].mxu0
        %v549 = vpop.f32.mrb[0].mxu0
        %v550 = vadd.f32 0.0, %v549
        %v551 = vpop.f32.mrb[0].mxu0
        %552 = vmatprep.mubr.bf16.mxu0 %v381
        %553 = vmatmul.mubr.bf16.gmra.mrb[0].mxu0 %v380
        %v554 = vpop.f32.mrb[0].mxu0
        %v555 = vadd.f32 0.0, %v554
        %v556 = vpop.f32.mrb[0].mxu0
        %v557 = vpop.f32.mrb[0].mxu0
        %v558 = vadd.f32 0.0, %v557
        %v559 = vpop.f32.mrb[0].mxu0
        %560 = vmatprep.mubr.bf16.mxu0 %v383
        %561 = vmatmul.mubr.bf16.gmra.mrb[0].mxu0 %v382
        %v562 = vpop.f32.mrb[0].mxu0
        %v563 = vadd.f32 0.0, %v562
        %v564 = vpop.f32.mrb[0].mxu0
        %v565 = vpop.f32.mrb[0].mxu0
        %v566 = vadd.f32 0.0, %v565
        %v567 = vpop.f32.mrb[0].mxu0
        %568 = vmatprep.mubr.bf16.mxu0 %v385
        %569 = vmatmul.mubr.bf16.gmra.mrb[0].mxu0 %v384
        %v570 = vpop.f32.mrb[0].mxu0
        %v571 = vadd.f32 0.0, %v570
        %v572 = vpop.f32.mrb[0].mxu0
        %v573 = vpop.f32.mrb[0].mxu0
        %v574 = vadd.f32 0.0, %v573
        %v575 = vpop.f32.mrb[0].mxu0
        %576 = vmatprep.mubr.bf16.mxu0 %v387
        %577 = vmatmul.mubr.bf16.gmra.mrb[0].mxu0 %v386
        %v578 = vpop.f32.mrb[0].mxu0
        %v579 = vadd.f32 0.0, %v578
        %v580 = vpop.f32.mrb[0].mxu0
        %v581 = vpop.f32.mrb[0].mxu0
        %v582 = vadd.f32 0.0, %v581
        %v583 = vpop.f32.mrb[0].mxu0
        %584 = vmatprep.mubr.bf16.mxu0 %v389
        %585 = vmatmul.mubr.bf16.gmra.mrb[0].mxu0 %v388
        %v586 = vpop.f32.mrb[0].mxu0
        %v587 = vadd.f32 0.0, %v586
        %v588 = vpop.f32.mrb[0].mxu0
        %v589 = vpop.f32.mrb[0].mxu0
        %v590 = vadd.f32 0.0, %v589
        %v591 = vpop.f32.mrb[0].mxu0
        %592 = vmatprep.mubr.bf16.mxu0 %v391
        %593 = vmatmul.mubr.bf16.gmra.mrb[0].mxu0 %v390
        %v594 = vpop.f32.mrb[0].mxu0
        %v595 = vadd.f32 0.0, %v594
        %v596 = vpop.f32.mrb[0].mxu0
        %v597 = vpop.f32.mrb[0].mxu0
        %v598 = vadd.f32 0.0, %v597
        %v599 = vpop.f32.mrb[0].mxu0
        %600 = vdwg.mxu0
        %v601 = vpack.c.bf16 %v542, %v539
        %v602 = vpack.c.bf16 %v550, %v547
        %v603 = vpack.c.bf16 %v558, %v555
        %v604 = vpack.c.bf16 %v566, %v563
        %v605 = vpack.c.bf16 %v574, %v571
        %v606 = vpack.c.bf16 %v582, %v579
        %v607 = vpack.c.bf16 %v590, %v587
        %v608 = vpack.c.bf16 %v598, %v595
        %v609 = vld [vmem:[#allocation7] sm:$0xf]
        %v610 = vld [vmem:[#allocation7 + $0x4] sm:$0xf]
        %v611 = vld [vmem:[#allocation7 + $0x8] sm:$0xf]
        %v612 = vld [vmem:[#allocation7 + $0xc] sm:$0xf]
        %v613 = vld [vmem:[#allocation7 + $0x10] sm:$0xf]
        %v614 = vld [vmem:[#allocation7 + $0x14] sm:$0xf]
        %v615 = vld [vmem:[#allocation7 + $0x18] sm:$0xf]
        %v616 = vld [vmem:[#allocation7 + $0x1c] sm:$0xf]
        %v617 = vld [vmem:[#allocation7 + $0x20] sm:$0xf]
        %v618 = vld [vmem:[#allocation7 + $0x24] sm:$0xf]
        %v619 = vld [vmem:[#allocation7 + $0x28] sm:$0xf]
        %v620 = vld [vmem:[#allocation7 + $0x2c] sm:$0xf]
        %v621 = vld [vmem:[#allocation7 + $0x30] sm:$0xf]
        %v622 = vld [vmem:[#allocation7 + $0x34] sm:$0xf]
        %v623 = vld [vmem:[#allocation7 + $0x38] sm:$0xf]
        %v624 = vld [vmem:[#allocation7 + $0x3c] sm:$0xf]
        %v625 = vld [vmem:[%s3] sm:$0x1]
        %v626 = vlaneseq
        %v627 = vshrl.u32 %v626, 7
        %v628 = vsub.s32 0, %v627
        %v629 = vrot.slane %v625, %v628
        %v646 = vunpack.c.l.b16 %v609
        %v647 = vunpack.c.l.b16 %v610
        %v648 = vunpack.c.l.b16 %v611
        %v649 = vunpack.c.l.b16 %v612
        %v650 = vunpack.c.l.b16 %v613
        %v651 = vunpack.c.l.b16 %v614
        %v652 = vunpack.c.l.b16 %v615
        %v653 = vunpack.c.l.b16 %v616
        %v654 = vunpack.c.l.b16 %v617
        %v655 = vunpack.c.l.b16 %v618
        %v656 = vunpack.c.l.b16 %v619
        %v657 = vunpack.c.l.b16 %v620
        %v658 = vunpack.c.l.b16 %v621
        %v659 = vunpack.c.l.b16 %v622
        %v660 = vunpack.c.l.b16 %v623
        %v661 = vunpack.c.l.b16 %v624
        %v662 = vpack.c.b16 %v647, %v646
        %v663 = vpack.c.b16 %v649, %v648
        %v664 = vpack.c.b16 %v651, %v650
        %v665 = vpack.c.b16 %v653, %v652
        %v666 = vpack.c.b16 %v655, %v654
        %v667 = vpack.c.b16 %v657, %v656
        %v668 = vpack.c.b16 %v659, %v658
        %v669 = vpack.c.b16 %v661, %v660
        %678 = vmatprep.subr.bf16.mxu0 0
        %679 = vmatpush1.bf16.msra.mxu0 %v662
        %680 = vmatprep.subr.bf16.mxu0 0
        %681 = vmatpush1.bf16.msra.mxu0 %v663
        %682 = vmatprep.subr.bf16.mxu0 0
        %683 = vmatpush1.bf16.msra.mxu0 %v664
        %684 = vmatprep.subr.bf16.mxu0 0
        %685 = vmatpush1.bf16.msra.mxu0 %v665
        %686 = vmatprep.subr.bf16.mxu0 0
        %687 = vmatpush1.bf16.msra.mxu0 %v666
        %688 = vmatprep.subr.bf16.mxu0 0
        %689 = vmatpush1.bf16.msra.mxu0 %v667
        %690 = vmatprep.subr.bf16.mxu0 0
        %691 = vmatpush1.bf16.msra.mxu0 %v668
        %692 = vmatprep.subr.bf16.mxu0 0
        %693 = vmatpush1.bf16.msra.mxu0 %v669
        %694 = vmatprep.subr.bf16.mxu0 0
        %695 = vmatpush1.bf16.msra.mxu0 0
        %696 = vmatprep.subr.bf16.mxu0 0
        %697 = vmatpush1.bf16.msra.mxu0 0
        %698 = vmatprep.subr.bf16.mxu0 0
        %699 = vmatpush1.bf16.msra.mxu0 0
        %700 = vmatprep.subr.bf16.mxu0 0
        %701 = vmatpush1.bf16.msra.mxu0 0
        %702 = vmatprep.subr.bf16.mxu0 0
        %703 = vmatpush1.bf16.msra.mxu0 0
        %704 = vmatprep.subr.bf16.mxu0 0
        %705 = vmatpush1.bf16.msra.mxu0 0
        %706 = vmatprep.subr.bf16.mxu0 0
        %707 = vmatpush1.bf16.msra.mxu0 0
        %708 = vmatprep.subr.bf16.mxu0 0
        %709 = vmatpush1.bf16.msra.mxu0 0
        %710 = vmatprep.mubr.bf16.mxu0 0
        %711 = vmatmul.mubr.bf16.gmra.mrb[0].mxu0 %v601
        %v712 = vpop.f32.mrb[0].mxu0
        %v713 = vadd.f32 %v629, %v712
        %v714 = vpop.f32.mrb[0].mxu0
        %v715 = vpop.f32.mrb[0].mxu0
        %v716 = vadd.f32 %v629, %v715
        %v717 = vpop.f32.mrb[0].mxu0
        %718 = vmatprep.mubr.bf16.mxu0 0
        %719 = vmatmul.mubr.bf16.gmra.mrb[0].mxu0 %v602
        %v720 = vpop.f32.mrb[0].mxu0
        %v721 = vadd.f32 %v629, %v720
        %v722 = vpop.f32.mrb[0].mxu0
        %v723 = vpop.f32.mrb[0].mxu0
        %v724 = vadd.f32 %v629, %v723
        %v725 = vpop.f32.mrb[0].mxu0
        %726 = vmatprep.mubr.bf16.mxu0 0
        %727 = vmatmul.mubr.bf16.gmra.mrb[0].mxu0 %v603
        %v728 = vpop.f32.mrb[0].mxu0
        %v729 = vadd.f32 %v629, %v728
        %v730 = vpop.f32.mrb[0].mxu0
        %v731 = vpop.f32.mrb[0].mxu0
        %v732 = vadd.f32 %v629, %v731
        %v733 = vpop.f32.mrb[0].mxu0
        %734 = vmatprep.mubr.bf16.mxu0 0
        %735 = vmatmul.mubr.bf16.gmra.mrb[0].mxu0 %v604
        %v736 = vpop.f32.mrb[0].mxu0
        %v737 = vadd.f32 %v629, %v736
        %v738 = vpop.f32.mrb[0].mxu0
        %v739 = vpop.f32.mrb[0].mxu0
        %v740 = vadd.f32 %v629, %v739
        %v741 = vpop.f32.mrb[0].mxu0
        %742 = vmatprep.mubr.bf16.mxu0 0
        %743 = vmatmul.mubr.bf16.gmra.mrb[0].mxu0 %v605
        %v744 = vpop.f32.mrb[0].mxu0
        %v745 = vadd.f32 %v629, %v744
        %v746 = vpop.f32.mrb[0].mxu0
        %v747 = vpop.f32.mrb[0].mxu0
        %v748 = vadd.f32 %v629, %v747
        %v749 = vpop.f32.mrb[0].mxu0
        %750 = vmatprep.mubr.bf16.mxu0 0
        %751 = vmatmul.mubr.bf16.gmra.mrb[0].mxu0 %v606
        %v752 = vpop.f32.mrb[0].mxu0
        %v753 = vadd.f32 %v629, %v752
        %v754 = vpop.f32.mrb[0].mxu0
        %v755 = vpop.f32.mrb[0].mxu0
        %v756 = vadd.f32 %v629, %v755
        %v757 = vpop.f32.mrb[0].mxu0
        %758 = vmatprep.mubr.bf16.mxu0 0
        %759 = vmatmul.mubr.bf16.gmra.mrb[0].mxu0 %v607
        %v760 = vpop.f32.mrb[0].mxu0
        %v761 = vadd.f32 %v629, %v760
        %v762 = vpop.f32.mrb[0].mxu0
        %v763 = vpop.f32.mrb[0].mxu0
        %v764 = vadd.f32 %v629, %v763
        %v765 = vpop.f32.mrb[0].mxu0
        %766 = vmatprep.mubr.bf16.mxu0 0
        %767 = vmatmul.mubr.bf16.gmra.mrb[0].mxu0 %v608
        %v768 = vpop.f32.mrb[0].mxu0
        %v769 = vadd.f32 %v629, %v768
        %v770 = vpop.f32.mrb[0].mxu0
        %v771 = vpop.f32.mrb[0].mxu0
        %v772 = vadd.f32 %v629, %v771
        %v773 = vpop.f32.mrb[0].mxu0
        %774 = vdwg.mxu0
        %v775 = vmax.f32 %v713, 0.0
        %v776 = vmax.f32 %v716, 0.0
        %v777 = vmax.f32 %v721, 0.0
        %v778 = vmax.f32 %v724, 0.0
        %v779 = vmax.f32 %v729, 0.0
        %v780 = vmax.f32 %v732, 0.0
        %v781 = vmax.f32 %v737, 0.0
        %v782 = vmax.f32 %v740, 0.0
        %v783 = vmax.f32 %v745, 0.0
        %v784 = vmax.f32 %v748, 0.0
        %v785 = vmax.f32 %v753, 0.0
        %v786 = vmax.f32 %v756, 0.0
        %v787 = vmax.f32 %v761, 0.0
        %v788 = vmax.f32 %v764, 0.0
        %v789 = vmax.f32 %v769, 0.0
        %v790 = vmax.f32 %v772, 0.0
        %791 = vst [vmem:[%s269] sm:$0xff] %v775
        %792 = vst [vmem:[%s269 + $0x8] sm:$0xff] %v776
        %793 = vst [vmem:[%s269 + $0x10] sm:$0xff] %v777
        %794 = vst [vmem:[%s269 + $0x18] sm:$0xff] %v778
        %795 = vst [vmem:[%s269 + $0x20] sm:$0xff] %v779
        %796 = vst [vmem:[%s269 + $0x28] sm:$0xff] %v780
        %797 = vst [vmem:[%s269 + $0x30] sm:$0xff] %v781
        %798 = vst [vmem:[%s269 + $0x38] sm:$0xff] %v782
        %799 = vst [vmem:[%s269 + $0x40] sm:$0xff] %v783
        %800 = vst [vmem:[%s269 + $0x48] sm:$0xff] %v784
        %801 = vst [vmem:[%s269 + $0x50] sm:$0xff] %v785
        %802 = vst [vmem:[%s269 + $0x58] sm:$0xff] %v786
        %803 = vst [vmem:[%s269 + $0x60] sm:$0xff] %v787
        %804 = vst [vmem:[%s269 + $0x68] sm:$0xff] %v788
        %805 = vst [vmem:[%s269 + $0x70] sm:$0xff] %v789
        %806 = vst [vmem:[%s269 + $0x78] sm:$0xff] %v790
        %v807 = vadd.f32 %v775, %v776
        %v808 = vadd.f32 %v807, %v777
        %v809 = vadd.f32 %v808, %v778
        %v810 = vadd.f32 %v809, %v779
        %v811 = vadd.f32 %v810, %v780
        %v812 = vadd.f32 %v811, %v781
        %v813 = vadd.f32 %v812, %v782
        %v814 = vadd.f32 %v813, %v783
        %v815 = vadd.f32 %v814, %v784
        %v816 = vadd.f32 %v815, %v785
        %v817 = vadd.f32 %v816, %v786
        %v818 = vadd.f32 %v817, %v787
        %v819 = vadd.f32 %v818, %v788
        %v820 = vadd.f32 %v819, %v789
        %v821 = vadd.f32 %v820, %v790
        %v822 = vrot.slane %v821, 4
        %v823 = vadd.f32 %v821, %v822
        %v824 = vrot.slane %v823, 2
        %v825 = vadd.f32 %v823, %v824
        %v826 = vrot.slane %v825, 1
        %v827 = vadd.f32 %v825, %v826
        %v828 = vmul.f32 %v775, %v775
        %v829 = vmul.f32 %v776, %v776
        %v830 = vmul.f32 %v777, %v777
        %v831 = vmul.f32 %v778, %v778
        %v832 = vmul.f32 %v779, %v779
        %v833 = vmul.f32 %v780, %v780
        %v834 = vmul.f32 %v781, %v781
        %v835 = vmul.f32 %v782, %v782
        %v836 = vmul.f32 %v783, %v783
        %v837 = vmul.f32 %v784, %v784
        %v838 = vmul.f32 %v785, %v785
        %v839 = vmul.f32 %v786, %v786
        %v840 = vmul.f32 %v787, %v787
        %v841 = vmul.f32 %v788, %v788
        %v842 = vmul.f32 %v789, %v789
        %v843 = vmul.f32 %v790, %v790
        %v844 = vadd.f32 %v828, %v829
        %v845 = vadd.f32 %v844, %v830
        %v846 = vadd.f32 %v845, %v831
        %v847 = vadd.f32 %v846, %v832
        %v848 = vadd.f32 %v847, %v833
        %v849 = vadd.f32 %v848, %v834
        %v850 = vadd.f32 %v849, %v835
        %v851 = vadd.f32 %v850, %v836
        %v852 = vadd.f32 %v851, %v837
        %v853 = vadd.f32 %v852, %v838
        %v854 = vadd.f32 %v853, %v839
        %v855 = vadd.f32 %v854, %v840
        %v856 = vadd.f32 %v855, %v841
        %v857 = vadd.f32 %v856, %v842
        %v858 = vadd.f32 %v857, %v843
        %v859 = vrot.slane %v858, 4
        %v860 = vadd.f32 %v858, %v859
        %v861 = vrot.slane %v860, 2
        %v862 = vadd.f32 %v860, %v861
        %v863 = vrot.slane %v862, 1
        %v864 = vadd.f32 %v862, %v863
        %v865 = vld [vmem:[#allocation9] sm:$0xff]
        %vm866 = vcmask 1040384
        %v867 = vsel %vm866, %v827, %v864
        %vm868 = vcmask 1041408
        %v869 = vsel %vm868, %v867, 0.0
        %v870 = vadd.f32 %v865, %v869
        %871 = vst [vmem:[#allocation9] sm:$0xff] %v870
        %s872 = sand.u32 %s122, 1
        %s873 = scalar_lea.sflag [#allocation4], %s872
        %s874 = sand.u32 %s122, 1
        %s875 = smul.addr %s874, 128
        %s876 = scalar_lea.vmem [#allocation8], %s875
        // Predicated region
        $region53: #{tpu_custom_call.1} parent=35 // pred_check
          %p877 = pneg %p132
        $region54: #{tpu_custom_call.1} parent=35 // pred_check_branch
          %879 = sbr.rel (%p877) target = $region56
        $region55: #{tpu_custom_call.1} parent=35 // pred_region
          %s880 = smul.u32 16, %s25
          %s882 = ssub.s32 2048, 2048
          %883 = vsyncadd %s873, %s882
          %s884 = smul.addr %s880, 128
          %s885 = scalar_lea.hbm %s4, %s884
          %s886 = sshll.u32 %s876, 4
          %s887 = int_to_ptr.vmem [resolvable:$true] %s886
          %892 = dma.vmem_to_hbm [thread:$0]  %s887, 2048, %s885, %s873, 128, 128, 8
        $region56: #{tpu_custom_call.1} parent=35 // pred_fallthru
          _
        // Predicated region
        $region57: #{tpu_custom_call.1} parent=35 // pred_check
          %p893 = pneg %p153
        $region58: #{tpu_custom_call.1} parent=35 // pred_check_branch
          %895 = sbr.rel (%p893) target = $region60
        $region59: #{tpu_custom_call.1} parent=35 // pred_region
          %s897 = ssub.s32 128, 128
          %898 = vsyncadd [#allocation10], %s897
          %s900 = sshll.u32 [#allocation9], 4
          %s901 = int_to_ptr.vmem [resolvable:$true] %s900
          %903 = dma.vmem_to_hbm [thread:$0]  %s901, 128, %s5, [#allocation10]
        $region60: #{tpu_custom_call.1} parent=35 // pred_fallthru
          _
        // Predicated region
        $region61: #{tpu_custom_call.1} parent=35 // pred_check
          %p904 = pneg %p153
        $region62: #{tpu_custom_call.1} parent=35 // pred_check_branch
          %906 = sbr.rel (%p904) target = $region64
        $region63: #{tpu_custom_call.1} parent=35 // pred_region
          %907 = dma.done [#allocation10], 128
        $region64: #{tpu_custom_call.1} parent=35 // pred_fallthru
          _
      $region36: #{tpu_custom_call.1} parent=5 // pred_fallthru
        _
      %p908 = scmp.le.s32.totalorder 2, %s20
      // Predicated region
      $region65: #{tpu_custom_call.1} parent=5 // pred_check
        %p909 = pneg %p908
      $region66: #{tpu_custom_call.1} parent=5 // pred_check_branch
        %911 = sbr.rel (%p909) target = $region68
      $region67: #{tpu_custom_call.1} parent=5 // pred_region
        %s912 = ssub.s32 %s20, 2
        // Predicated region
        $region69: #{tpu_custom_call.1} parent=67 // pred_check
          %p913 = pneg %p138
        $region70: #{tpu_custom_call.1} parent=67 // pred_check_branch
          %915 = sbr.rel (%p913) target = $region72
        $region71: #{tpu_custom_call.1} parent=67 // pred_region
          %s916 = sand.u32 %s123, 1
          %s917 = scalar_lea.sflag [#allocation4], %s916
          %s918 = sand.u32 %s123, 1
          %s919 = smul.addr %s918, 128
          %s920 = scalar_lea.vmem [#allocation8], %s919
          %921 = dma.done %s917, 2048
        $region72: #{tpu_custom_call.1} parent=67 // pred_fallthru
          _
      $region68: #{tpu_custom_call.1} parent=5 // pred_fallthru
        _
    $region6: #{tpu_custom_call.1} parent=1 // loop_footer
      %s24 = sadd.s32 1, %s20
    $region7: #{tpu_custom_call.1} parent=1 // loop_footer_branch
      %19 = sbr.rel target = $region3
    $region8: #{tpu_custom_call.1} parent=1 // loop_exit
      _
    %922 = vsyncpa [#allocation3], 1
    %s923 = scalar_lea.sflag [#allocation3], 1
    %924 = vsyncpa %s923, 1
    %925 = vsyncpa [#allocation6], 1
    %926 = vsyncpa [#allocation4], 1
    %s927 = scalar_lea.sflag [#allocation4], 1
    %928 = vsyncpa %s927, 1
    %929 = vsyncpa [#allocation10], 1

</llo_original>
